<compile_context>
chip_gen: v6e
topology: v6e:2x2x1
jax: 0.10.0
libtpu: 0.0.40
codegen_flags: <defaults>
</compile_context>

<pallas_src>
import functools

import jax
import jax.numpy as jnp
from jax.experimental import pallas as pl
from jax.experimental.pallas import tpu as pltpu

BN_EPS = 1e-5

# Hidden widths are fixed by the module architecture.
D1, D2, D3 = 64, 128, 256
# Static lane offsets of the packed per-feature vectors (all 128-aligned).
OFF_G1, OFF_BE1 = 0, 128
OFF_G2, OFF_BE2 = 256, 384
OFF_G3, OFF_BE3 = 512, 768
OFF_B4 = 1024


def _bn_relu(x, gamma, beta):
    # BatchNorm1d (training mode, biased variance) + ReLU. One-pass statistics.
    inv_n = 1.0 / x.shape[0]
    mean = jnp.sum(x, axis=0, keepdims=True) * inv_n
    ex2 = jnp.sum(x * x, axis=0, keepdims=True) * inv_n
    var = jnp.maximum(ex2 - mean * mean, 0.0)
    xn = (x - mean) * jax.lax.rsqrt(var + BN_EPS)
    return jnp.maximum(xn * gamma + beta, 0.0)


def decoder_kernel(z_ref, w1_ref, w2_ref, w3_ref, w4_ref, vec_ref, out_ref,
                   *, out_dim):
    # Packed per-feature vectors, sliced with static offsets (shape (1, width)).
    g1 = vec_ref[:, pl.ds(OFF_G1, D1)]
    be1 = vec_ref[:, pl.ds(OFF_BE1, D1)]
    g2 = vec_ref[:, pl.ds(OFF_G2, D2)]
    be2 = vec_ref[:, pl.ds(OFF_BE2, D2)]
    g3 = vec_ref[:, pl.ds(OFF_G3, D3)]
    be3 = vec_ref[:, pl.ds(OFF_BE3, D3)]
    b4 = vec_ref[:, pl.ds(OFF_B4, out_dim)]

    # Linear_0 (bias dropped, cancelled by BN) -> BatchNorm_0 -> ReLU_0
    h = jnp.dot(z_ref[...].astype(jnp.bfloat16), w1_ref[...],
                preferred_element_type=jnp.float32)
    h = _bn_relu(h, g1, be1)

    # Linear_1 -> BatchNorm_1 -> ReLU_1
    h = jnp.dot(h.astype(jnp.bfloat16), w2_ref[...],
                preferred_element_type=jnp.float32)
    h = _bn_relu(h, g2, be2)

    # Linear_2 -> BatchNorm_2 -> ReLU_2
    h = jnp.dot(h.astype(jnp.bfloat16), w3_ref[...],
                preferred_element_type=jnp.float32)
    h = _bn_relu(h, g3, be3)

    # Linear_3 (bias kept; no BN) -> Sigmoid
    h = jnp.dot(h.astype(jnp.bfloat16), w4_ref[...],
                preferred_element_type=jnp.float32) + b4
    out_ref[...] = jax.nn.sigmoid(h)


def init_decoder_params(key, shape, nhid=16, ncond=0):
    """Parameter init matching nn.Linear / nn.BatchNorm1d shapes.

    Weights stored as (din, dout) in bfloat16 (kernel computes x @ W == x @ W_pt.T).
    Biases b1..b3 are generated for parity with the PyTorch module but are not
    used by the kernel (exactly cancelled by training-mode BatchNorm).
    """
    c, w, h = shape
    dims = [nhid + ncond, D1, D2, D3, c * w * h]
    params = {}
    keys = jax.random.split(key, 2 * (len(dims) - 1))
    for i in range(len(dims) - 1):
        din, dout = dims[i], dims[i + 1]
        bound = 1.0 / jnp.sqrt(din)
        params[f"w{i+1}"] = jax.random.uniform(
            keys[2 * i], (din, dout), jnp.float32, -bound, bound
        ).astype(jnp.bfloat16)
        params[f"b{i+1}"] = jax.random.uniform(
            keys[2 * i + 1], (1, dout), jnp.float32, -bound, bound)
        if i < len(dims) - 2:  # BatchNorm after every layer except the last
            params[f"g{i+1}"] = jnp.ones((1, dout), jnp.float32)
            params[f"be{i+1}"] = jnp.zeros((1, dout), jnp.float32)
    return params, dims


def _pad_lanes(v, width):
    return jnp.pad(v, ((0, 0), (0, width - v.shape[1])))


def _pack_vectors(params, out_dim):
    """Pack g1..g3, be1..be3, b4 into one lane-aligned (1, P) f32 buffer."""
    out_dim_padded = ((out_dim + 127) // 128) * 128
    return jnp.concatenate(
        [
            _pad_lanes(params["g1"], 128), _pad_lanes(params["be1"], 128),   # 0, 128
            _pad_lanes(params["g2"], 128), _pad_lanes(params["be2"], 128),   # 256, 384
            params["g3"], params["be3"],                                     # 512, 768
            _pad_lanes(params["b4"], out_dim_padded),                        # 1024
        ],
        axis=1,
    ).astype(jnp.float32)


def decoder_forward(params, shape, z, y=None):
    c, w, h = shape
    if y is not None:
        z = jnp.concatenate([z, y], axis=1)  # glue: cat before the kernel
    n = z.shape[0]
    out_dim = c * w * h

    packed = _pack_vectors(params, out_dim)
    args = (z, params["w1"], params["w2"], params["w3"], params["w4"], packed)

    vmem_spec = pl.BlockSpec(memory_space=pltpu.MemorySpace.VMEM)
    flat = pl.pallas_call(
        functools.partial(decoder_kernel, out_dim=out_dim),
        out_shape=jax.ShapeDtypeStruct((n, out_dim), jnp.float32),
        in_specs=[vmem_spec] * len(args),
        out_specs=vmem_spec,
    )(*args)

    return flat.reshape(n, c, w, h)


if __name__ == "__main__":
    shape = (4, 16, 16)   # (c, w, h)
    nhid, ncond = 16, 8
    batch = 8

    key = jax.random.PRNGKey(0)
    kp, kz, ky = jax.random.split(key, 3)

    params, _ = init_decoder_params(kp, shape, nhid=nhid, ncond=ncond)
    z = jax.random.normal(kz, (batch, nhid), jnp.float32)
    y = jax.random.normal(ky, (batch, ncond), jnp.float32)

    fwd = jax.jit(functools.partial(decoder_forward, params, shape))
    out = fwd(z, y)
    jax.block_until_ready(out)

    assert out.shape == (batch, *shape), out.shape
    assert bool(jnp.all((out >= 0.0) & (out <= 1.0)))
    assert bool(jnp.all(jnp.isfinite(out)))
    print("KERNEL_OK")
</pallas_src>

<mosaic_0001>
module attributes {stable_mosaic.version = 11 : i64} {
  func.func @decoder_kernel(%arg0: memref<8x24xf32, #tpu.memory_space<vmem>>, %arg1: memref<24x64xbf16, #tpu.memory_space<vmem>>, %arg2: memref<64x128xbf16, #tpu.memory_space<vmem>>, %arg3: memref<128x256xbf16, #tpu.memory_space<vmem>>, %arg4: memref<256x1024xbf16, #tpu.memory_space<vmem>>, %arg5: memref<1x2048xf32, #tpu.memory_space<vmem>>, %arg6: memref<8x1024xf32, #tpu.memory_space<vmem>>) attributes {dimension_semantics = [], scalar_prefetch = 0 : i64, scratch_operands = 0 : i64, tpu.core_type = #tpu.core_type<tc>} {
    %c0 = arith.constant 0 : index
    %c0_0 = arith.constant 0 : index
    %0 = vector.load %arg5[%c0, %c0_0] : memref<1x2048xf32, #tpu.memory_space<vmem>>, vector<1x64xf32>
    %c0_1 = arith.constant 0 : index
    %c128 = arith.constant 128 : index
    %1 = vector.load %arg5[%c0_1, %c128] : memref<1x2048xf32, #tpu.memory_space<vmem>>, vector<1x64xf32>
    %c0_2 = arith.constant 0 : index
    %c256 = arith.constant 256 : index
    %2 = vector.load %arg5[%c0_2, %c256] : memref<1x2048xf32, #tpu.memory_space<vmem>>, vector<1x128xf32>
    %c0_3 = arith.constant 0 : index
    %c384 = arith.constant 384 : index
    %3 = vector.load %arg5[%c0_3, %c384] : memref<1x2048xf32, #tpu.memory_space<vmem>>, vector<1x128xf32>
    %c0_4 = arith.constant 0 : index
    %c512 = arith.constant 512 : index
    %4 = vector.load %arg5[%c0_4, %c512] : memref<1x2048xf32, #tpu.memory_space<vmem>>, vector<1x256xf32>
    %c0_5 = arith.constant 0 : index
    %c768 = arith.constant 768 : index
    %5 = vector.load %arg5[%c0_5, %c768] : memref<1x2048xf32, #tpu.memory_space<vmem>>, vector<1x256xf32>
    %c0_6 = arith.constant 0 : index
    %c1024 = arith.constant 1024 : index
    %6 = vector.load %arg5[%c0_6, %c1024] : memref<1x2048xf32, #tpu.memory_space<vmem>>, vector<1x1024xf32>
    %c0_7 = arith.constant 0 : index
    %c0_8 = arith.constant 0 : index
    %7 = vector.load %arg0[%c0_7, %c0_8] : memref<8x24xf32, #tpu.memory_space<vmem>>, vector<8x24xf32>
    %8 = arith.truncf %7 : vector<8x24xf32> to vector<8x24xbf16>
    %c0_9 = arith.constant 0 : index
    %c0_10 = arith.constant 0 : index
    %9 = vector.load %arg1[%c0_9, %c0_10] : memref<24x64xbf16, #tpu.memory_space<vmem>>, vector<24x64xbf16>
    %cst = arith.constant dense<0.000000e+00> : vector<8x64xf32>
    %10 = tpu.matmul %8, %9, %cst {dimension_numbers = #tpu.dot_dimension_numbers<[1], [0], [0], [1], [0, 0, 1, 1], [], []>} : vector<8x24xbf16>, vector<24x64xbf16>, vector<8x64xf32> -> vector<8x64xf32>
    %cst_11 = arith.constant dense<0.000000e+00> : vector<64xf32>
    %11 = vector.multi_reduction <add>, %10, %cst_11 [0] : vector<8x64xf32> to vector<64xf32>
    %12 = vector.shape_cast %11 : vector<64xf32> to vector<1x64xf32>
    %cst_12 = arith.constant 1.250000e-01 : f32
    %13 = vector.broadcast %cst_12 : f32 to vector<1x64xf32>
    %14 = arith.mulf %12, %13 : vector<1x64xf32>
    %15 = arith.mulf %10, %10 : vector<8x64xf32>
    %cst_13 = arith.constant dense<0.000000e+00> : vector<64xf32>
    %16 = vector.multi_reduction <add>, %15, %cst_13 [0] : vector<8x64xf32> to vector<64xf32>
    %17 = vector.shape_cast %16 : vector<64xf32> to vector<1x64xf32>
    %cst_14 = arith.constant 1.250000e-01 : f32
    %18 = vector.broadcast %cst_14 : f32 to vector<1x64xf32>
    %19 = arith.mulf %17, %18 : vector<1x64xf32>
    %20 = arith.mulf %14, %14 : vector<1x64xf32>
    %21 = arith.subf %19, %20 : vector<1x64xf32>
    %cst_15 = arith.constant 0.000000e+00 : f32
    %22 = vector.broadcast %cst_15 : f32 to vector<1x64xf32>
    %23 = arith.maximumf %21, %22 : vector<1x64xf32>
    %24 = vector.broadcast %14 : vector<1x64xf32> to vector<8x64xf32>
    %25 = arith.subf %10, %24 : vector<8x64xf32>
    %cst_16 = arith.constant 9.99999974E-6 : f32
    %26 = vector.broadcast %cst_16 : f32 to vector<1x64xf32>
    %27 = arith.addf %23, %26 : vector<1x64xf32>
    %28 = math.rsqrt %27 : vector<1x64xf32>
    %29 = vector.broadcast %28 : vector<1x64xf32> to vector<8x64xf32>
    %30 = arith.mulf %25, %29 : vector<8x64xf32>
    %31 = vector.broadcast %0 : vector<1x64xf32> to vector<8x64xf32>
    %32 = arith.mulf %30, %31 : vector<8x64xf32>
    %33 = vector.broadcast %1 : vector<1x64xf32> to vector<8x64xf32>
    %34 = arith.addf %32, %33 : vector<8x64xf32>
    %cst_17 = arith.constant 0.000000e+00 : f32
    %35 = vector.broadcast %cst_17 : f32 to vector<8x64xf32>
    %36 = arith.maximumf %34, %35 : vector<8x64xf32>
    %37 = arith.truncf %36 : vector<8x64xf32> to vector<8x64xbf16>
    %c0_18 = arith.constant 0 : index
    %c0_19 = arith.constant 0 : index
    %38 = vector.load %arg2[%c0_18, %c0_19] : memref<64x128xbf16, #tpu.memory_space<vmem>>, vector<64x128xbf16>
    %cst_20 = arith.constant dense<0.000000e+00> : vector<8x128xf32>
    %39 = tpu.matmul %37, %38, %cst_20 {dimension_numbers = #tpu.dot_dimension_numbers<[1], [0], [0], [1], [0, 0, 1, 1], [], []>} : vector<8x64xbf16>, vector<64x128xbf16>, vector<8x128xf32> -> vector<8x128xf32>
    %cst_21 = arith.constant dense<0.000000e+00> : vector<128xf32>
    %40 = vector.multi_reduction <add>, %39, %cst_21 [0] : vector<8x128xf32> to vector<128xf32>
    %41 = vector.shape_cast %40 : vector<128xf32> to vector<1x128xf32>
    %cst_22 = arith.constant 1.250000e-01 : f32
    %42 = vector.broadcast %cst_22 : f32 to vector<1x128xf32>
    %43 = arith.mulf %41, %42 : vector<1x128xf32>
    %44 = arith.mulf %39, %39 : vector<8x128xf32>
    %cst_23 = arith.constant dense<0.000000e+00> : vector<128xf32>
    %45 = vector.multi_reduction <add>, %44, %cst_23 [0] : vector<8x128xf32> to vector<128xf32>
    %46 = vector.shape_cast %45 : vector<128xf32> to vector<1x128xf32>
    %cst_24 = arith.constant 1.250000e-01 : f32
    %47 = vector.broadcast %cst_24 : f32 to vector<1x128xf32>
    %48 = arith.mulf %46, %47 : vector<1x128xf32>
    %49 = arith.mulf %43, %43 : vector<1x128xf32>
    %50 = arith.subf %48, %49 : vector<1x128xf32>
    %cst_25 = arith.constant 0.000000e+00 : f32
    %51 = vector.broadcast %cst_25 : f32 to vector<1x128xf32>
    %52 = arith.maximumf %50, %51 : vector<1x128xf32>
    %53 = vector.broadcast %43 : vector<1x128xf32> to vector<8x128xf32>
    %54 = arith.subf %39, %53 : vector<8x128xf32>
    %cst_26 = arith.constant 9.99999974E-6 : f32
    %55 = vector.broadcast %cst_26 : f32 to vector<1x128xf32>
    %56 = arith.addf %52, %55 : vector<1x128xf32>
    %57 = math.rsqrt %56 : vector<1x128xf32>
    %58 = vector.broadcast %57 : vector<1x128xf32> to vector<8x128xf32>
    %59 = arith.mulf %54, %58 : vector<8x128xf32>
    %60 = vector.broadcast %2 : vector<1x128xf32> to vector<8x128xf32>
    %61 = arith.mulf %59, %60 : vector<8x128xf32>
    %62 = vector.broadcast %3 : vector<1x128xf32> to vector<8x128xf32>
    %63 = arith.addf %61, %62 : vector<8x128xf32>
    %cst_27 = arith.constant 0.000000e+00 : f32
    %64 = vector.broadcast %cst_27 : f32 to vector<8x128xf32>
    %65 = arith.maximumf %63, %64 : vector<8x128xf32>
    %66 = arith.truncf %65 : vector<8x128xf32> to vector<8x128xbf16>
    %c0_28 = arith.constant 0 : index
    %c0_29 = arith.constant 0 : index
    %67 = vector.load %arg3[%c0_28, %c0_29] : memref<128x256xbf16, #tpu.memory_space<vmem>>, vector<128x256xbf16>
    %cst_30 = arith.constant dense<0.000000e+00> : vector<8x256xf32>
    %68 = tpu.matmul %66, %67, %cst_30 {dimension_numbers = #tpu.dot_dimension_numbers<[1], [0], [0], [1], [0, 0, 1, 1], [], []>} : vector<8x128xbf16>, vector<128x256xbf16>, vector<8x256xf32> -> vector<8x256xf32>
    %cst_31 = arith.constant dense<0.000000e+00> : vector<256xf32>
    %69 = vector.multi_reduction <add>, %68, %cst_31 [0] : vector<8x256xf32> to vector<256xf32>
    %70 = vector.shape_cast %69 : vector<256xf32> to vector<1x256xf32>
    %cst_32 = arith.constant 1.250000e-01 : f32
    %71 = vector.broadcast %cst_32 : f32 to vector<1x256xf32>
    %72 = arith.mulf %70, %71 : vector<1x256xf32>
    %73 = arith.mulf %68, %68 : vector<8x256xf32>
    %cst_33 = arith.constant dense<0.000000e+00> : vector<256xf32>
    %74 = vector.multi_reduction <add>, %73, %cst_33 [0] : vector<8x256xf32> to vector<256xf32>
    %75 = vector.shape_cast %74 : vector<256xf32> to vector<1x256xf32>
    %cst_34 = arith.constant 1.250000e-01 : f32
    %76 = vector.broadcast %cst_34 : f32 to vector<1x256xf32>
    %77 = arith.mulf %75, %76 : vector<1x256xf32>
    %78 = arith.mulf %72, %72 : vector<1x256xf32>
    %79 = arith.subf %77, %78 : vector<1x256xf32>
    %cst_35 = arith.constant 0.000000e+00 : f32
    %80 = vector.broadcast %cst_35 : f32 to vector<1x256xf32>
    %81 = arith.maximumf %79, %80 : vector<1x256xf32>
    %82 = vector.broadcast %72 : vector<1x256xf32> to vector<8x256xf32>
    %83 = arith.subf %68, %82 : vector<8x256xf32>
    %cst_36 = arith.constant 9.99999974E-6 : f32
    %84 = vector.broadcast %cst_36 : f32 to vector<1x256xf32>
    %85 = arith.addf %81, %84 : vector<1x256xf32>
    %86 = math.rsqrt %85 : vector<1x256xf32>
    %87 = vector.broadcast %86 : vector<1x256xf32> to vector<8x256xf32>
    %88 = arith.mulf %83, %87 : vector<8x256xf32>
    %89 = vector.broadcast %4 : vector<1x256xf32> to vector<8x256xf32>
    %90 = arith.mulf %88, %89 : vector<8x256xf32>
    %91 = vector.broadcast %5 : vector<1x256xf32> to vector<8x256xf32>
    %92 = arith.addf %90, %91 : vector<8x256xf32>
    %cst_37 = arith.constant 0.000000e+00 : f32
    %93 = vector.broadcast %cst_37 : f32 to vector<8x256xf32>
    %94 = arith.maximumf %92, %93 : vector<8x256xf32>
    %95 = arith.truncf %94 : vector<8x256xf32> to vector<8x256xbf16>
    %c0_38 = arith.constant 0 : index
    %c0_39 = arith.constant 0 : index
    %96 = vector.load %arg4[%c0_38, %c0_39] : memref<256x1024xbf16, #tpu.memory_space<vmem>>, vector<256x1024xbf16>
    %cst_40 = arith.constant dense<0.000000e+00> : vector<8x1024xf32>
    %97 = tpu.matmul %95, %96, %cst_40 {dimension_numbers = #tpu.dot_dimension_numbers<[1], [0], [0], [1], [0, 0, 1, 1], [], []>} : vector<8x256xbf16>, vector<256x1024xbf16>, vector<8x1024xf32> -> vector<8x1024xf32>
    %98 = vector.broadcast %6 : vector<1x1024xf32> to vector<8x1024xf32>
    %99 = arith.addf %97, %98 : vector<8x1024xf32>
    %100 = arith.negf %99 : vector<8x1024xf32>
    %101 = math.exp %100 : vector<8x1024xf32>
    %cst_41 = arith.constant 1.000000e+00 : f32
    %102 = vector.broadcast %cst_41 : f32 to vector<8x1024xf32>
    %103 = arith.addf %102, %101 : vector<8x1024xf32>
    %104 = arith.divf %102, %103 : vector<8x1024xf32>
    %c0_42 = arith.constant 0 : index
    %c0_43 = arith.constant 0 : index
    %105 = vector.load %arg6[%c0_42, %c0_43] : memref<8x1024xf32, #tpu.memory_space<vmem>>, vector<8x1024xf32>
    tpu.vector_store %arg6[%c0_42, %c0_43], %104 {strides = array<i32>} : memref<8x1024xf32, #tpu.memory_space<vmem>>, vector<8x1024xf32>,
    return
  }
}

</mosaic_0001>

<llo_original>
// kernel: decoder_forward.1
$region0: #{decoder_forward.1}
  #allocation0 [shape = 'u32[]', space=smem, size = 0x4, offset = 0x4, fixed_abs, tag = 'smem constant byte address 0x4 - core index']
  #allocation1 [shape = 'u32[144,128]{1,0:T(1,128)}', space=vmem, size = 0x12000, scoped, tag = 'internal scratch']
  %s0 = inlined_call_operand.vmem [shape: f32[8,24], index: 0, kind: input, shape index: {}]
  %s1 = inlined_call_operand.vmem [shape: bf16[24,64], index: 1, kind: input, shape index: {}]
  %s2 = inlined_call_operand.vmem [shape: bf16[64,128], index: 2, kind: input, shape index: {}]
  %s3 = inlined_call_operand.hbm [shape: bf16[128,256], index: 3, kind: input, shape index: {}]
  %s4 = inlined_call_operand.hbm [shape: bf16[256,1024], index: 4, kind: input, shape index: {}]
  %s5 = inlined_call_operand.vmem [shape: f32[1,2048], index: 5, kind: input, shape index: {}]
  %s6 = inlined_call_operand.vmem [shape: f32[8,1024], index: 6, kind: output, shape index: {}]
  %s7 = sld [smem:[#allocation0]]
  $region42: #{decoder_forward.1} parent=0
    _
  %s9 = ssub.s32 1, %s7
  %s10 = scalar_select 0, %s9, %s7
  $region1: #{decoder_forward.1} parent=0
    #allocation2 [shape = 'u8[65536]{0}', space=vmem, size = 0x10000, scoped, tag = 'input window, operand 3, single buffered']
    #allocation3 [shape = 's32[1]{0}', space=sflag, size = 0x4, scoped, tag = 'scoped memory for decoder_forward.1']
    #allocation4 [shape = 'u8[524288]{0}', space=vmem, size = 0x80000, scoped, tag = 'input window, operand 4, single buffered']
    #allocation5 [shape = 's32[1]{0}', space=sflag, size = 0x4, scoped, tag = 'scoped memory for decoder_forward.1']
    %11 = vsyncpa [#allocation3], 0
    %12 = vsyncpa [#allocation5], 0
    // Predicated region
    $region2: #{decoder_forward.1} parent=1 // pred_check
      _
    $region3: #{decoder_forward.1} parent=1 // pred_check_branch
      %14 = sbr.rel (0) target = $region5
    $region4: #{decoder_forward.1} parent=1 // pred_region
      _
    $region5: #{decoder_forward.1} parent=1 // pred_fallthru
      _
    // Predicated region
    $region6: #{decoder_forward.1} parent=1 // pred_check
      _
    $region7: #{decoder_forward.1} parent=1 // pred_check_branch
      %16 = sbr.rel (0) target = $region9
    $region8: #{decoder_forward.1} parent=1 // pred_region
      _
    $region9: #{decoder_forward.1} parent=1 // pred_fallthru
      _
    // Predicated region
    $region10: #{decoder_forward.1} parent=1 // pred_check
      _
    $region11: #{decoder_forward.1} parent=1 // pred_check_branch
      %18 = sbr.rel (0) target = $region13
    $region12: #{decoder_forward.1} parent=1 // pred_region
      _
    $region13: #{decoder_forward.1} parent=1 // pred_fallthru
      _
    // Predicated region
    $region14: #{decoder_forward.1} parent=1 // pred_check
      _
    $region15: #{decoder_forward.1} parent=1 // pred_check_branch
      %20 = sbr.rel (0) target = $region17
    $region16: #{decoder_forward.1} parent=1 // pred_region
      %s22 = ssub.s32 2048, 2048
      %23 = vsyncadd [#allocation3], %s22
      %s24 = sshll.u32 [#allocation2], 4
      %s25 = int_to_ptr.vmem [resolvable:$true] %s24
      %30 = dma.hbm_to_vmem [thread:$0]  %s3, 2048, %s25, [#allocation3], 128, 128, 8
    $region17: #{decoder_forward.1} parent=1 // pred_fallthru
      _
    // Predicated region
    $region18: #{decoder_forward.1} parent=1 // pred_check
      _
    $region19: #{decoder_forward.1} parent=1 // pred_check_branch
      %32 = sbr.rel (0) target = $region21
    $region20: #{decoder_forward.1} parent=1 // pred_region
      %s34 = ssub.s32 16384, 16384
      %35 = vsyncadd [#allocation5], %s34
      %s36 = sshll.u32 [#allocation4], 4
      %s37 = int_to_ptr.vmem [resolvable:$true] %s36
      %42 = dma.hbm_to_vmem [thread:$0]  %s4, 16384, %s37, [#allocation5], 512, 512, 32
    $region21: #{decoder_forward.1} parent=1 // pred_fallthru
      _
    // Predicated region
    $region22: #{decoder_forward.1} parent=1 // pred_check
      _
    $region23: #{decoder_forward.1} parent=1 // pred_check_branch
      %44 = sbr.rel (0) target = $region25
    $region24: #{decoder_forward.1} parent=1 // pred_region
      _
    $region25: #{decoder_forward.1} parent=1 // pred_fallthru
      _
    // Predicated region
    $region26: #{decoder_forward.1} parent=1 // pred_check
      _
    $region27: #{decoder_forward.1} parent=1 // pred_check_branch
      %46 = sbr.rel (0) target = $region29
    $region28: #{decoder_forward.1} parent=1 // pred_region
      %47 = dma.done [#allocation3], 2048
    $region29: #{decoder_forward.1} parent=1 // pred_fallthru
      _
    // Predicated region
    $region30: #{decoder_forward.1} parent=1 // pred_check
      _
    $region31: #{decoder_forward.1} parent=1 // pred_check_branch
      %49 = sbr.rel (0) target = $region33
    $region32: #{decoder_forward.1} parent=1 // pred_region
      %50 = dma.done [#allocation5], 16384
    $region33: #{decoder_forward.1} parent=1 // pred_fallthru
      _
    %v52 = vld [vmem:[%s5] sm:$0x1]
    %v53 = vld [vmem:[%s5 + $0x1] sm:$0x1]
    %v54 = vld [vmem:[%s5 + $0x2] sm:$0x1]
    %v55 = vld [vmem:[%s5 + $0x3] sm:$0x1]
    %v56 = vld [vmem:[%s5 + $0x4] sm:$0x3]
    %v57 = vld [vmem:[%s5 + $0x6] sm:$0x3]
    %v58 = vld [vmem:[%s5 + $0x8] sm:$0xff]
    %v59 = vld [vmem:[%s0] sm:$0xff]
    %v60 = vpack.c.bf16 %v59, %v59
    %v61 = vld [vmem:[%s1] sm:$0xf]
    %v62 = vld [vmem:[%s1 + $0x4] sm:$0xf]
    %v63 = vld [vmem:[%s1 + $0x8] sm:$0xf]
    %v67 = vunpack.c.l.b16 %v61
    %v68 = vunpack.c.l.b16 %v62
    %v69 = vunpack.c.l.b16 %v63
    %v70 = vpack.c.b16 %v68, %v67
    %v71 = vpack.c.b16 %v69, %v69
    %vm73 = vcmask 195584
    %v75 = vsel %vm73, %v60, 0
    %vm77 = vcmask 1043456
    %v79 = vsel %vm77, %v71, 0
    %81 = vmatprep.subr.bf16.mxu0 0
    %82 = vmatpush1.bf16.msra.mxu0 0
    %83 = vmatprep.subr.bf16.mxu0 0
    %84 = vmatpush1.bf16.msra.mxu0 0
    %85 = vmatprep.subr.bf16.mxu0 0
    %86 = vmatpush1.bf16.msra.mxu0 0
    %87 = vmatprep.subr.bf16.mxu0 0
    %88 = vmatpush1.bf16.msra.mxu0 0
    %89 = vmatprep.subr.bf16.mxu0 0
    %90 = vmatpush1.bf16.msra.mxu0 0
    %91 = vmatprep.subr.bf16.mxu0 0
    %92 = vmatpush1.bf16.msra.mxu0 0
    %93 = vmatprep.subr.bf16.mxu0 0
    %94 = vmatpush1.bf16.msra.mxu0 %v79
    %95 = vmatprep.subr.bf16.mxu0 0
    %96 = vmatpush1.bf16.msra.mxu0 %v70
    %97 = vmatprep.subr.bf16.mxu0 0
    %98 = vmatpush2.bf16.msra.mxu0 0
    %99 = vmatprep.subr.bf16.mxu0 0
    %100 = vmatpush2.bf16.msra.mxu0 0
    %101 = vmatprep.subr.bf16.mxu0 0
    %102 = vmatpush2.bf16.msra.mxu0 0
    %103 = vmatprep.subr.bf16.mxu0 0
    %104 = vmatpush2.bf16.msra.mxu0 0
    %105 = vmatprep.subr.bf16.mxu0 0
    %106 = vmatpush2.bf16.msra.mxu0 0
    %107 = vmatprep.subr.bf16.mxu0 0
    %108 = vmatpush2.bf16.msra.mxu0 0
    %109 = vmatprep.subr.bf16.mxu0 0
    %110 = vmatpush2.bf16.msra.mxu0 0
    %111 = vmatprep.subr.bf16.mxu0 0
    %112 = vmatpush2.bf16.msra.mxu0 0
    %113 = vmatprep.mubr.bf16.mxu0 0
    %114 = vmatmul.mubr.bf16.gmra.mxu0 %v75
    %v115 = vpop.f32.mrf.mxu0
    %v116 = vadd.f32 0.0, %v115
    %v117 = vpop.f32.mrf.mxu0
    %v118 = vpop.f32.mrf.mxu0
    %v119 = vpop.f32.mrf.mxu0
    %120 = vdwg.mxu0
    %vm121 = vcmask 523264
    %v122 = vsel %vm121, %v116, 0.0
    %v123 = vrot.slane %v122, 4
    %v124 = vadd.f32 %v122, %v123
    %v125 = vrot.slane %v124, 2
    %v126 = vadd.f32 %v124, %v125
    %v127 = vrot.slane %v126, 1
    %v128 = vadd.f32 %v126, %v127
    %v129 = vmul.f32 %v128, 0.125
    %v130 = vmul.f32 %v116, %v116
    %v131 = vsel %vm121, %v130, 0.0
    %v132 = vrot.slane %v131, 4
    %v133 = vadd.f32 %v131, %v132
    %v134 = vrot.slane %v133, 2
    %v135 = vadd.f32 %v133, %v134
    %v136 = vrot.slane %v135, 1
    %v137 = vadd.f32 %v135, %v136
    %v138 = vmul.f32 %v137, 0.125
    %v139 = vmul.f32 %v129, %v129
    %v140 = vsub.f32 %v138, %v139
    %v141 = vmax.f32 %v140, 0.0
    %v142 = vsub.f32 %v116, %v129
    %v143 = vadd.f32 %v141, 1e-05
    %v144 = vrsqrt.pop %v143
    %v145 = vmul.f32 %v142, %v144
    %v147 = vlaneseq
    %v148 = vshrl.u32 %v147, 7
    %v149 = vsub.s32 0, %v148
    %v150 = vrot.slane %v52, %v149
    %v152 = vmul.f32 %v145, %v150
    %v154 = vlaneseq
    %v155 = vshrl.u32 %v154, 7
    %v156 = vsub.s32 0, %v155
    %v157 = vrot.slane %v53, %v156
    %v159 = vadd.f32 %v152, %v157
    %v160 = vmax.f32 %v159, 0.0
    %v161 = vpack.c.bf16 %v160, %v160
    %v162 = vld [vmem:[%s2] sm:$0xf]
    %v163 = vld [vmem:[%s2 + $0x4] sm:$0xf]
    %v164 = vld [vmem:[%s2 + $0x8] sm:$0xf]
    %v165 = vld [vmem:[%s2 + $0xc] sm:$0xf]
    %v166 = vld [vmem:[%s2 + $0x10] sm:$0xf]
    %v167 = vld [vmem:[%s2 + $0x14] sm:$0xf]
    %v168 = vld [vmem:[%s2 + $0x18] sm:$0xf]
    %v169 = vld [vmem:[%s2 + $0x1c] sm:$0xf]
    %v178 = vunpack.c.l.b16 %v162
    %v179 = vunpack.c.l.b16 %v163
    %v180 = vunpack.c.l.b16 %v164
    %v181 = vunpack.c.l.b16 %v165
    %v182 = vunpack.c.l.b16 %v166
    %v183 = vunpack.c.l.b16 %v167
    %v184 = vunpack.c.l.b16 %v168
    %v185 = vunpack.c.l.b16 %v169
    %v186 = vpack.c.b16 %v179, %v178
    %v187 = vpack.c.b16 %v181, %v180
    %v188 = vpack.c.b16 %v183, %v182
    %v189 = vpack.c.b16 %v185, %v184
    %v195 = vsel %vm121, %v161, 0
    %197 = vmatprep.subr.bf16.mxu0 0
    %198 = vmatpush1.bf16.msra.mxu0 0
    %199 = vmatprep.subr.bf16.mxu0 0
    %200 = vmatpush1.bf16.msra.mxu0 0
    %201 = vmatprep.subr.bf16.mxu0 0
    %202 = vmatpush1.bf16.msra.mxu0 0
    %203 = vmatprep.subr.bf16.mxu0 0
    %204 = vmatpush1.bf16.msra.mxu0 0
    %205 = vmatprep.subr.bf16.mxu0 0
    %206 = vmatpush1.bf16.msra.mxu0 %v189
    %207 = vmatprep.subr.bf16.mxu0 0
    %208 = vmatpush1.bf16.msra.mxu0 %v188
    %209 = vmatprep.subr.bf16.mxu0 0
    %210 = vmatpush1.bf16.msra.mxu0 %v187
    %211 = vmatprep.subr.bf16.mxu0 0
    %212 = vmatpush1.bf16.msra.mxu0 %v186
    %213 = vmatprep.subr.bf16.mxu0 0
    %214 = vmatpush2.bf16.msra.mxu0 0
    %215 = vmatprep.subr.bf16.mxu0 0
    %216 = vmatpush2.bf16.msra.mxu0 0
    %217 = vmatprep.subr.bf16.mxu0 0
    %218 = vmatpush2.bf16.msra.mxu0 0
    %219 = vmatprep.subr.bf16.mxu0 0
    %220 = vmatpush2.bf16.msra.mxu0 0
    %221 = vmatprep.subr.bf16.mxu0 0
    %222 = vmatpush2.bf16.msra.mxu0 0
    %223 = vmatprep.subr.bf16.mxu0 0
    %224 = vmatpush2.bf16.msra.mxu0 0
    %225 = vmatprep.subr.bf16.mxu0 0
    %226 = vmatpush2.bf16.msra.mxu0 0
    %227 = vmatprep.subr.bf16.mxu0 0
    %228 = vmatpush2.bf16.msra.mxu0 0
    %229 = vmatprep.mubr.bf16.mxu0 0
    %230 = vmatmul.mubr.bf16.gmra.mxu0 %v195
    %v231 = vpop.f32.mrf.mxu0
    %v232 = vadd.f32 0.0, %v231
    %v233 = vpop.f32.mrf.mxu0
    %v234 = vpop.f32.mrf.mxu0
    %v235 = vpop.f32.mrf.mxu0
    %236 = vdwg.mxu0
    %v237 = vrot.slane %v232, 4
    %v238 = vadd.f32 %v232, %v237
    %v239 = vrot.slane %v238, 2
    %v240 = vadd.f32 %v238, %v239
    %v241 = vrot.slane %v240, 1
    %v242 = vadd.f32 %v240, %v241
    %v243 = vmul.f32 %v242, 0.125
    %v244 = vmul.f32 %v232, %v232
    %v245 = vrot.slane %v244, 4
    %v246 = vadd.f32 %v244, %v245
    %v247 = vrot.slane %v246, 2
    %v248 = vadd.f32 %v246, %v247
    %v249 = vrot.slane %v248, 1
    %v250 = vadd.f32 %v248, %v249
    %v251 = vmul.f32 %v250, 0.125
    %v252 = vmul.f32 %v243, %v243
    %v253 = vsub.f32 %v251, %v252
    %v254 = vmax.f32 %v253, 0.0
    %v255 = vsub.f32 %v232, %v243
    %v256 = vadd.f32 %v254, 1e-05
    %v257 = vrsqrt.pop %v256
    %v258 = vmul.f32 %v255, %v257
    %v260 = vlaneseq
    %v261 = vshrl.u32 %v260, 7
    %v262 = vsub.s32 0, %v261
    %v263 = vrot.slane %v54, %v262
    %v265 = vmul.f32 %v258, %v263
    %v267 = vlaneseq
    %v268 = vshrl.u32 %v267, 7
    %v269 = vsub.s32 0, %v268
    %v270 = vrot.slane %v55, %v269
    %v272 = vadd.f32 %v265, %v270
    %v273 = vmax.f32 %v272, 0.0
    %v274 = vpack.c.bf16 %v273, %v273
    %v275 = vld [vmem:[#allocation2] sm:$0xff]
    %v276 = vld [vmem:[#allocation2 + $0x8] sm:$0xff]
    %v277 = vld [vmem:[#allocation2 + $0x10] sm:$0xff]
    %v278 = vld [vmem:[#allocation2 + $0x18] sm:$0xff]
    %v279 = vld [vmem:[#allocation2 + $0x20] sm:$0xff]
    %v280 = vld [vmem:[#allocation2 + $0x28] sm:$0xff]
    %v281 = vld [vmem:[#allocation2 + $0x30] sm:$0xff]
    %v282 = vld [vmem:[#allocation2 + $0x38] sm:$0xff]
    %v283 = vld [vmem:[#allocation2 + $0x40] sm:$0xff]
    %v284 = vld [vmem:[#allocation2 + $0x48] sm:$0xff]
    %v285 = vld [vmem:[#allocation2 + $0x50] sm:$0xff]
    %v286 = vld [vmem:[#allocation2 + $0x58] sm:$0xff]
    %v287 = vld [vmem:[#allocation2 + $0x60] sm:$0xff]
    %v288 = vld [vmem:[#allocation2 + $0x68] sm:$0xff]
    %v289 = vld [vmem:[#allocation2 + $0x70] sm:$0xff]
    %v290 = vld [vmem:[#allocation2 + $0x78] sm:$0xff]
    %v307 = vunpack.c.l.b16 %v275
    %v308 = vunpack.c.h.b16 %v275
    %v309 = vunpack.c.l.b16 %v276
    %v310 = vunpack.c.h.b16 %v276
    %v311 = vunpack.c.l.b16 %v277
    %v312 = vunpack.c.h.b16 %v277
    %v313 = vunpack.c.l.b16 %v278
    %v314 = vunpack.c.h.b16 %v278
    %v315 = vunpack.c.l.b16 %v279
    %v316 = vunpack.c.h.b16 %v279
    %v317 = vunpack.c.l.b16 %v280
    %v318 = vunpack.c.h.b16 %v280
    %v319 = vunpack.c.l.b16 %v281
    %v320 = vunpack.c.h.b16 %v281
    %v321 = vunpack.c.l.b16 %v282
    %v322 = vunpack.c.h.b16 %v282
    %v323 = vunpack.c.l.b16 %v283
    %v324 = vunpack.c.h.b16 %v283
    %v325 = vunpack.c.l.b16 %v284
    %v326 = vunpack.c.h.b16 %v284
    %v327 = vunpack.c.l.b16 %v285
    %v328 = vunpack.c.h.b16 %v285
    %v329 = vunpack.c.l.b16 %v286
    %v330 = vunpack.c.h.b16 %v286
    %v331 = vunpack.c.l.b16 %v287
    %v332 = vunpack.c.h.b16 %v287
    %v333 = vunpack.c.l.b16 %v288
    %v334 = vunpack.c.h.b16 %v288
    %v335 = vunpack.c.l.b16 %v289
    %v336 = vunpack.c.h.b16 %v289
    %v337 = vunpack.c.l.b16 %v290
    %v338 = vunpack.c.h.b16 %v290
    %v339 = vpack.c.b16 %v309, %v307
    %v340 = vpack.c.b16 %v310, %v308
    %v341 = vpack.c.b16 %v313, %v311
    %v342 = vpack.c.b16 %v314, %v312
    %v343 = vpack.c.b16 %v317, %v315
    %v344 = vpack.c.b16 %v318, %v316
    %v345 = vpack.c.b16 %v321, %v319
    %v346 = vpack.c.b16 %v322, %v320
    %v347 = vpack.c.b16 %v325, %v323
    %v348 = vpack.c.b16 %v326, %v324
    %v349 = vpack.c.b16 %v329, %v327
    %v350 = vpack.c.b16 %v330, %v328
    %v351 = vpack.c.b16 %v333, %v331
    %v352 = vpack.c.b16 %v334, %v332
    %v353 = vpack.c.b16 %v337, %v335
    %v354 = vpack.c.b16 %v338, %v336
    %371 = vmatprep.subr.bf16.mxu0 %v354
    %372 = vmatpush1.bf16.msra.mxu0 %v353
    %373 = vmatprep.subr.bf16.mxu0 %v352
    %374 = vmatpush1.bf16.msra.mxu0 %v351
    %375 = vmatprep.subr.bf16.mxu0 %v350
    %376 = vmatpush1.bf16.msra.mxu0 %v349
    %377 = vmatprep.subr.bf16.mxu0 %v348
    %378 = vmatpush1.bf16.msra.mxu0 %v347
    %379 = vmatprep.subr.bf16.mxu0 %v346
    %380 = vmatpush1.bf16.msra.mxu0 %v345
    %381 = vmatprep.subr.bf16.mxu0 %v344
    %382 = vmatpush1.bf16.msra.mxu0 %v343
    %383 = vmatprep.subr.bf16.mxu0 %v342
    %384 = vmatpush1.bf16.msra.mxu0 %v341
    %385 = vmatprep.subr.bf16.mxu0 %v340
    %386 = vmatpush1.bf16.msra.mxu0 %v339
    %387 = vmatprep.subr.bf16.mxu0 0
    %388 = vmatpush2.bf16.msra.mxu0 0
    %389 = vmatprep.subr.bf16.mxu0 0
    %390 = vmatpush2.bf16.msra.mxu0 0
    %391 = vmatprep.subr.bf16.mxu0 0
    %392 = vmatpush2.bf16.msra.mxu0 0
    %393 = vmatprep.subr.bf16.mxu0 0
    %394 = vmatpush2.bf16.msra.mxu0 0
    %395 = vmatprep.subr.bf16.mxu0 0
    %396 = vmatpush2.bf16.msra.mxu0 0
    %397 = vmatprep.subr.bf16.mxu0 0
    %398 = vmatpush2.bf16.msra.mxu0 0
    %399 = vmatprep.subr.bf16.mxu0 0
    %400 = vmatpush2.bf16.msra.mxu0 0
    %401 = vmatprep.subr.bf16.mxu0 0
    %402 = vmatpush2.bf16.msra.mxu0 0
    %403 = vmatprep.mubr.bf16.mxu0 0
    %404 = vmatmul.mubr.bf16.gmra.mxu0 %v274
    %v405 = vpop.f32.mrf.mxu0
    %v406 = vadd.f32 0.0, %v405
    %v407 = vpop.f32.mrf.mxu0
    %v408 = vadd.f32 0.0, %v407
    %v409 = vpop.f32.mrf.mxu0
    %v410 = vpop.f32.mrf.mxu0
    %411 = vdwg.mxu0
    %v412 = vrot.slane %v406, 4
    %v413 = vadd.f32 %v406, %v412
    %v414 = vrot.slane %v413, 2
    %v415 = vadd.f32 %v413, %v414
    %v416 = vrot.slane %v415, 1
    %v417 = vadd.f32 %v415, %v416
    %v418 = vrot.slane %v408, 4
    %v419 = vadd.f32 %v408, %v418
    %v420 = vrot.slane %v419, 2
    %v421 = vadd.f32 %v419, %v420
    %v422 = vrot.slane %v421, 1
    %v423 = vadd.f32 %v421, %v422
    %v424 = vmul.f32 %v417, 0.125
    %v425 = vmul.f32 %v423, 0.125
    %v426 = vmul.f32 %v406, %v406
    %v427 = vmul.f32 %v408, %v408
    %v428 = vrot.slane %v426, 4
    %v429 = vadd.f32 %v426, %v428
    %v430 = vrot.slane %v429, 2
    %v431 = vadd.f32 %v429, %v430
    %v432 = vrot.slane %v431, 1
    %v433 = vadd.f32 %v431, %v432
    %v434 = vrot.slane %v427, 4
    %v435 = vadd.f32 %v427, %v434
    %v436 = vrot.slane %v435, 2
    %v437 = vadd.f32 %v435, %v436
    %v438 = vrot.slane %v437, 1
    %v439 = vadd.f32 %v437, %v438
    %v440 = vmul.f32 %v433, 0.125
    %v441 = vmul.f32 %v439, 0.125
    %v442 = vmul.f32 %v424, %v424
    %v443 = vmul.f32 %v425, %v425
    %v444 = vsub.f32 %v440, %v442
    %v445 = vsub.f32 %v441, %v443
    %v446 = vmax.f32 %v444, 0.0
    %v447 = vmax.f32 %v445, 0.0
    %v448 = vsub.f32 %v406, %v424
    %v449 = vsub.f32 %v408, %v425
    %v450 = vadd.f32 %v446, 1e-05
    %v451 = vadd.f32 %v447, 1e-05
    %v452 = vrsqrt.pop %v450
    %v453 = vrsqrt.pop %v451
    %v454 = vmul.f32 %v448, %v452
    %v455 = vmul.f32 %v449, %v453
    %v457 = vlaneseq
    %v458 = vshrl.u32 %v457, 7
    %v459 = vsub.s32 0, %v458
    %v460 = vrot.slane %v56, %v459
    %v461 = vlaneseq
    %v462 = vshrl.u32 %v461, 7
    %v463 = vsub.s32 1, %v462
    %v464 = vrot.slane %v56, %v463
    %v467 = vmul.f32 %v454, %v460
    %v468 = vmul.f32 %v455, %v464
    %v470 = vlaneseq
    %v471 = vshrl.u32 %v470, 7
    %v472 = vsub.s32 0, %v471
    %v473 = vrot.slane %v57, %v472
    %v474 = vlaneseq
    %v475 = vshrl.u32 %v474, 7
    %v476 = vsub.s32 1, %v475
    %v477 = vrot.slane %v57, %v476
    %v480 = vadd.f32 %v467, %v473
    %v481 = vadd.f32 %v468, %v477
    %v482 = vmax.f32 %v480, 0.0
    %v483 = vmax.f32 %v481, 0.0
    %v484 = vpack.c.bf16 %v482, %v482
    %v485 = vpack.c.bf16 %v483, %v483
    %v486 = vld [vmem:[#allocation4] sm:$0xff]
    %v487 = vld [vmem:[#allocation4 + $0x8] sm:$0xff]
    %v488 = vld [vmem:[#allocation4 + $0x10] sm:$0xff]
    %v489 = vld [vmem:[#allocation4 + $0x18] sm:$0xff]
    %v490 = vld [vmem:[#allocation4 + $0x20] sm:$0xff]
    %v491 = vld [vmem:[#allocation4 + $0x28] sm:$0xff]
    %v492 = vld [vmem:[#allocation4 + $0x30] sm:$0xff]
    %v493 = vld [vmem:[#allocation4 + $0x38] sm:$0xff]
    %v494 = vld [vmem:[#allocation4 + $0x40] sm:$0xff]
    %v495 = vld [vmem:[#allocation4 + $0x48] sm:$0xff]
    %v496 = vld [vmem:[#allocation4 + $0x50] sm:$0xff]
    %v497 = vld [vmem:[#allocation4 + $0x58] sm:$0xff]
    %v498 = vld [vmem:[#allocation4 + $0x60] sm:$0xff]
    %v499 = vld [vmem:[#allocation4 + $0x68] sm:$0xff]
    %v500 = vld [vmem:[#allocation4 + $0x70] sm:$0xff]
    %v501 = vld [vmem:[#allocation4 + $0x78] sm:$0xff]
    %v502 = vld [vmem:[#allocation4 + $0x80] sm:$0xff]
    %v503 = vld [vmem:[#allocation4 + $0x88] sm:$0xff]
    %v504 = vld [vmem:[#allocation4 + $0x90] sm:$0xff]
    %v505 = vld [vmem:[#allocation4 + $0x98] sm:$0xff]
    %v506 = vld [vmem:[#allocation4 + $0xa0] sm:$0xff]
    %v507 = vld [vmem:[#allocation4 + $0xa8] sm:$0xff]
    %v508 = vld [vmem:[#allocation4 + $0xb0] sm:$0xff]
    %v509 = vld [vmem:[#allocation4 + $0xb8] sm:$0xff]
    %v510 = vld [vmem:[#allocation4 + $0xc0] sm:$0xff]
    %v511 = vld [vmem:[#allocation4 + $0xc8] sm:$0xff]
    %v512 = vld [vmem:[#allocation4 + $0xd0] sm:$0xff]
    %v513 = vld [vmem:[#allocation4 + $0xd8] sm:$0xff]
    %v514 = vld [vmem:[#allocation4 + $0xe0] sm:$0xff]
    %v515 = vld [vmem:[#allocation4 + $0xe8] sm:$0xff]
    %v516 = vld [vmem:[#allocation4 + $0xf0] sm:$0xff]
    %v517 = vld [vmem:[#allocation4 + $0xf8] sm:$0xff]
    %v518 = vld [vmem:[#allocation4 + $0x100] sm:$0xff]
    %v519 = vld [vmem:[#allocation4 + $0x108] sm:$0xff]
    %v520 = vld [vmem:[#allocation4 + $0x110] sm:$0xff]
    %v521 = vld [vmem:[#allocation4 + $0x118] sm:$0xff]
    %v522 = vld [vmem:[#allocation4 + $0x120] sm:$0xff]
    %v523 = vld [vmem:[#allocation4 + $0x128] sm:$0xff]
    %v524 = vld [vmem:[#allocation4 + $0x130] sm:$0xff]
    %v525 = vld [vmem:[#allocation4 + $0x138] sm:$0xff]
    %v526 = vld [vmem:[#allocation4 + $0x140] sm:$0xff]
    %v527 = vld [vmem:[#allocation4 + $0x148] sm:$0xff]
    %v528 = vld [vmem:[#allocation4 + $0x150] sm:$0xff]
    %v529 = vld [vmem:[#allocation4 + $0x158] sm:$0xff]
    %v530 = vld [vmem:[#allocation4 + $0x160] sm:$0xff]
    %v531 = vld [vmem:[#allocation4 + $0x168] sm:$0xff]
    %v532 = vld [vmem:[#allocation4 + $0x170] sm:$0xff]
    %v533 = vld [vmem:[#allocation4 + $0x178] sm:$0xff]
    %v534 = vld [vmem:[#allocation4 + $0x180] sm:$0xff]
    %v535 = vld [vmem:[#allocation4 + $0x188] sm:$0xff]
    %v536 = vld [vmem:[#allocation4 + $0x190] sm:$0xff]
    %v537 = vld [vmem:[#allocation4 + $0x198] sm:$0xff]
    %v538 = vld [vmem:[#allocation4 + $0x1a0] sm:$0xff]
    %v539 = vld [vmem:[#allocation4 + $0x1a8] sm:$0xff]
    %v540 = vld [vmem:[#allocation4 + $0x1b0] sm:$0xff]
    %v541 = vld [vmem:[#allocation4 + $0x1b8] sm:$0xff]
    %v542 = vld [vmem:[#allocation4 + $0x1c0] sm:$0xff]
    %v543 = vld [vmem:[#allocation4 + $0x1c8] sm:$0xff]
    %v544 = vld [vmem:[#allocation4 + $0x1d0] sm:$0xff]
    %v545 = vld [vmem:[#allocation4 + $0x1d8] sm:$0xff]
    %v546 = vld [vmem:[#allocation4 + $0x1e0] sm:$0xff]
    %v547 = vld [vmem:[#allocation4 + $0x1e8] sm:$0xff]
    %v548 = vld [vmem:[#allocation4 + $0x1f0] sm:$0xff]
    %v549 = vld [vmem:[#allocation4 + $0x1f8] sm:$0xff]
    %v550 = vld [vmem:[#allocation4 + $0x200] sm:$0xff]
    %v551 = vld [vmem:[#allocation4 + $0x208] sm:$0xff]
    %v552 = vld [vmem:[#allocation4 + $0x210] sm:$0xff]
    %v553 = vld [vmem:[#allocation4 + $0x218] sm:$0xff]
    %v554 = vld [vmem:[#allocation4 + $0x220] sm:$0xff]
    %v555 = vld [vmem:[#allocation4 + $0x228] sm:$0xff]
    %v556 = vld [vmem:[#allocation4 + $0x230] sm:$0xff]
    %v557 = vld [vmem:[#allocation4 + $0x238] sm:$0xff]
    %v558 = vld [vmem:[#allocation4 + $0x240] sm:$0xff]
    %v559 = vld [vmem:[#allocation4 + $0x248] sm:$0xff]
    %v560 = vld [vmem:[#allocation4 + $0x250] sm:$0xff]
    %v561 = vld [vmem:[#allocation4 + $0x258] sm:$0xff]
    %v562 = vld [vmem:[#allocation4 + $0x260] sm:$0xff]
    %v563 = vld [vmem:[#allocation4 + $0x268] sm:$0xff]
    %v564 = vld [vmem:[#allocation4 + $0x270] sm:$0xff]
    %v565 = vld [vmem:[#allocation4 + $0x278] sm:$0xff]
    %v566 = vld [vmem:[#allocation4 + $0x280] sm:$0xff]
    %v567 = vld [vmem:[#allocation4 + $0x288] sm:$0xff]
    %v568 = vld [vmem:[#allocation4 + $0x290] sm:$0xff]
    %v569 = vld [vmem:[#allocation4 + $0x298] sm:$0xff]
    %v570 = vld [vmem:[#allocation4 + $0x2a0] sm:$0xff]
    %v571 = vld [vmem:[#allocation4 + $0x2a8] sm:$0xff]
    %v572 = vld [vmem:[#allocation4 + $0x2b0] sm:$0xff]
    %v573 = vld [vmem:[#allocation4 + $0x2b8] sm:$0xff]
    %v574 = vld [vmem:[#allocation4 + $0x2c0] sm:$0xff]
    %v575 = vld [vmem:[#allocation4 + $0x2c8] sm:$0xff]
    %v576 = vld [vmem:[#allocation4 + $0x2d0] sm:$0xff]
    %v577 = vld [vmem:[#allocation4 + $0x2d8] sm:$0xff]
    %v578 = vld [vmem:[#allocation4 + $0x2e0] sm:$0xff]
    %v579 = vld [vmem:[#allocation4 + $0x2e8] sm:$0xff]
    %v580 = vld [vmem:[#allocation4 + $0x2f0] sm:$0xff]
    %v581 = vld [vmem:[#allocation4 + $0x2f8] sm:$0xff]
    %v582 = vld [vmem:[#allocation4 + $0x300] sm:$0xff]
    %v583 = vld [vmem:[#allocation4 + $0x308] sm:$0xff]
    %v584 = vld [vmem:[#allocation4 + $0x310] sm:$0xff]
    %v585 = vld [vmem:[#allocation4 + $0x318] sm:$0xff]
    %v586 = vld [vmem:[#allocation4 + $0x320] sm:$0xff]
    %v587 = vld [vmem:[#allocation4 + $0x328] sm:$0xff]
    %v588 = vld [vmem:[#allocation4 + $0x330] sm:$0xff]
    %v589 = vld [vmem:[#allocation4 + $0x338] sm:$0xff]
    %v590 = vld [vmem:[#allocation4 + $0x340] sm:$0xff]
    %v591 = vld [vmem:[#allocation4 + $0x348] sm:$0xff]
    %v592 = vld [vmem:[#allocation4 + $0x350] sm:$0xff]
    %v593 = vld [vmem:[#allocation4 + $0x358] sm:$0xff]
    %v594 = vld [vmem:[#allocation4 + $0x360] sm:$0xff]
    %v595 = vld [vmem:[#allocation4 + $0x368] sm:$0xff]
    %v596 = vld [vmem:[#allocation4 + $0x370] sm:$0xff]
    %v597 = vld [vmem:[#allocation4 + $0x378] sm:$0xff]
    %v598 = vld [vmem:[#allocation4 + $0x380] sm:$0xff]
    %v599 = vld [vmem:[#allocation4 + $0x388] sm:$0xff]
    %v600 = vld [vmem:[#allocation4 + $0x390] sm:$0xff]
    %v601 = vld [vmem:[#allocation4 + $0x398] sm:$0xff]
    %v602 = vld [vmem:[#allocation4 + $0x3a0] sm:$0xff]
    %v603 = vld [vmem:[#allocation4 + $0x3a8] sm:$0xff]
    %v604 = vld [vmem:[#allocation4 + $0x3b0] sm:$0xff]
    %v605 = vld [vmem:[#allocation4 + $0x3b8] sm:$0xff]
    %v606 = vld [vmem:[#allocation4 + $0x3c0] sm:$0xff]
    %v607 = vld [vmem:[#allocation4 + $0x3c8] sm:$0xff]
    %v608 = vld [vmem:[#allocation4 + $0x3d0] sm:$0xff]
    %v609 = vld [vmem:[#allocation4 + $0x3d8] sm:$0xff]
    %v610 = vld [vmem:[#allocation4 + $0x3e0] sm:$0xff]
    %v611 = vld [vmem:[#allocation4 + $0x3e8] sm:$0xff]
    %v612 = vld [vmem:[#allocation4 + $0x3f0] sm:$0xff]
    %v613 = vld [vmem:[#allocation4 + $0x3f8] sm:$0xff]
    %v615 = vlaneseq
    %v616 = vshrl.u32 %v615, 7
    %v617 = vsub.s32 0, %v616
    %v618 = vrot.slane %v58, %v617
    %v619 = vlaneseq
    %v620 = vshrl.u32 %v619, 7
    %v621 = vsub.s32 1, %v620
    %v622 = vrot.slane %v58, %v621
    %v623 = vlaneseq
    %v624 = vshrl.u32 %v623, 7
    %v625 = vsub.s32 2, %v624
    %v626 = vrot.slane %v58, %v625
    %v627 = vlaneseq
    %v628 = vshrl.u32 %v627, 7
    %v629 = vsub.s32 3, %v628
    %v630 = vrot.slane %v58, %v629
    %v631 = vlaneseq
    %v632 = vshrl.u32 %v631, 7
    %v633 = vsub.s32 4, %v632
    %v634 = vrot.slane %v58, %v633
    %v635 = vlaneseq
    %v636 = vshrl.u32 %v635, 7
    %v637 = vsub.s32 5, %v636
    %v638 = vrot.slane %v58, %v637
    %v639 = vlaneseq
    %v640 = vshrl.u32 %v639, 7
    %v641 = vsub.s32 6, %v640
    %v642 = vrot.slane %v58, %v641
    %v643 = vlaneseq
    %v644 = vshrl.u32 %v643, 7
    %v645 = vsub.s32 7, %v644
    %v646 = vrot.slane %v58, %v645
    %v783 = vunpack.c.l.b16 %v486
    %v784 = vunpack.c.h.b16 %v486
    %v785 = vunpack.c.l.b16 %v487
    %v786 = vunpack.c.h.b16 %v487
    %v787 = vunpack.c.l.b16 %v488
    %v788 = vunpack.c.h.b16 %v488
    %v789 = vunpack.c.l.b16 %v489
    %v790 = vunpack.c.h.b16 %v489
    %v791 = vunpack.c.l.b16 %v490
    %v792 = vunpack.c.h.b16 %v490
    %v793 = vunpack.c.l.b16 %v491
    %v794 = vunpack.c.h.b16 %v491
    %v795 = vunpack.c.l.b16 %v492
    %v796 = vunpack.c.h.b16 %v492
    %v797 = vunpack.c.l.b16 %v493
    %v798 = vunpack.c.h.b16 %v493
    %v799 = vunpack.c.l.b16 %v494
    %v800 = vunpack.c.h.b16 %v494
    %v801 = vunpack.c.l.b16 %v495
    %v802 = vunpack.c.h.b16 %v495
    %v803 = vunpack.c.l.b16 %v496
    %v804 = vunpack.c.h.b16 %v496
    %v805 = vunpack.c.l.b16 %v497
    %v806 = vunpack.c.h.b16 %v497
    %v807 = vunpack.c.l.b16 %v498
    %v808 = vunpack.c.h.b16 %v498
    %v809 = vunpack.c.l.b16 %v499
    %v810 = vunpack.c.h.b16 %v499
    %v811 = vunpack.c.l.b16 %v500
    %v812 = vunpack.c.h.b16 %v500
    %v813 = vunpack.c.l.b16 %v501
    %v814 = vunpack.c.h.b16 %v501
    %v815 = vunpack.c.l.b16 %v502
    %v816 = vunpack.c.h.b16 %v502
    %v817 = vunpack.c.l.b16 %v503
    %v818 = vunpack.c.h.b16 %v503
    %v819 = vunpack.c.l.b16 %v504
    %v820 = vunpack.c.h.b16 %v504
    %v821 = vunpack.c.l.b16 %v505
    %v822 = vunpack.c.h.b16 %v505
    %v823 = vunpack.c.l.b16 %v506
    %v824 = vunpack.c.h.b16 %v506
    %v825 = vunpack.c.l.b16 %v507
    %v826 = vunpack.c.h.b16 %v507
    %v827 = vunpack.c.l.b16 %v508
    %v828 = vunpack.c.h.b16 %v508
    %v829 = vunpack.c.l.b16 %v509
    %v830 = vunpack.c.h.b16 %v509
    %v831 = vunpack.c.l.b16 %v510
    %v832 = vunpack.c.h.b16 %v510
    %v833 = vunpack.c.l.b16 %v511
    %v834 = vunpack.c.h.b16 %v511
    %v835 = vunpack.c.l.b16 %v512
    %v836 = vunpack.c.h.b16 %v512
    %v837 = vunpack.c.l.b16 %v513
    %v838 = vunpack.c.h.b16 %v513
    %v839 = vunpack.c.l.b16 %v514
    %v840 = vunpack.c.h.b16 %v514
    %v841 = vunpack.c.l.b16 %v515
    %v842 = vunpack.c.h.b16 %v515
    %v843 = vunpack.c.l.b16 %v516
    %v844 = vunpack.c.h.b16 %v516
    %v845 = vunpack.c.l.b16 %v517
    %v846 = vunpack.c.h.b16 %v517
    %v847 = vunpack.c.l.b16 %v518
    %v848 = vunpack.c.h.b16 %v518
    %v849 = vunpack.c.l.b16 %v519
    %v850 = vunpack.c.h.b16 %v519
    %v851 = vunpack.c.l.b16 %v520
    %v852 = vunpack.c.h.b16 %v520
    %v853 = vunpack.c.l.b16 %v521
    %v854 = vunpack.c.h.b16 %v521
    %v855 = vunpack.c.l.b16 %v522
    %v856 = vunpack.c.h.b16 %v522
    %v857 = vunpack.c.l.b16 %v523
    %v858 = vunpack.c.h.b16 %v523
    %v859 = vunpack.c.l.b16 %v524
    %v860 = vunpack.c.h.b16 %v524
    %v861 = vunpack.c.l.b16 %v525
    %v862 = vunpack.c.h.b16 %v525
    %v863 = vunpack.c.l.b16 %v526
    %v864 = vunpack.c.h.b16 %v526
    %v865 = vunpack.c.l.b16 %v527
    %v866 = vunpack.c.h.b16 %v527
    %v867 = vunpack.c.l.b16 %v528
    %v868 = vunpack.c.h.b16 %v528
    %v869 = vunpack.c.l.b16 %v529
    %v870 = vunpack.c.h.b16 %v529
    %v871 = vunpack.c.l.b16 %v530
    %v872 = vunpack.c.h.b16 %v530
    %v873 = vunpack.c.l.b16 %v531
    %v874 = vunpack.c.h.b16 %v531
    %v875 = vunpack.c.l.b16 %v532
    %v876 = vunpack.c.h.b16 %v532
    %v877 = vunpack.c.l.b16 %v533
    %v878 = vunpack.c.h.b16 %v533
    %v879 = vunpack.c.l.b16 %v534
    %v880 = vunpack.c.h.b16 %v534
    %v881 = vunpack.c.l.b16 %v535
    %v882 = vunpack.c.h.b16 %v535
    %v883 = vunpack.c.l.b16 %v536
    %v884 = vunpack.c.h.b16 %v536
    %v885 = vunpack.c.l.b16 %v537
    %v886 = vunpack.c.h.b16 %v537
    %v887 = vunpack.c.l.b16 %v538
    %v888 = vunpack.c.h.b16 %v538
    %v889 = vunpack.c.l.b16 %v539
    %v890 = vunpack.c.h.b16 %v539
    %v891 = vunpack.c.l.b16 %v540
    %v892 = vunpack.c.h.b16 %v540
    %v893 = vunpack.c.l.b16 %v541
    %v894 = vunpack.c.h.b16 %v541
    %v895 = vunpack.c.l.b16 %v542
    %v896 = vunpack.c.h.b16 %v542
    %v897 = vunpack.c.l.b16 %v543
    %v898 = vunpack.c.h.b16 %v543
    %v899 = vunpack.c.l.b16 %v544
    %v900 = vunpack.c.h.b16 %v544
    %v901 = vunpack.c.l.b16 %v545
    %v902 = vunpack.c.h.b16 %v545
    %v903 = vunpack.c.l.b16 %v546
    %v904 = vunpack.c.h.b16 %v546
    %v905 = vunpack.c.l.b16 %v547
    %v906 = vunpack.c.h.b16 %v547
    %v907 = vunpack.c.l.b16 %v548
    %v908 = vunpack.c.h.b16 %v548
    %v909 = vunpack.c.l.b16 %v549
    %v910 = vunpack.c.h.b16 %v549
    %v911 = vunpack.c.l.b16 %v550
    %v912 = vunpack.c.h.b16 %v550
    %v913 = vunpack.c.l.b16 %v551
    %v914 = vunpack.c.h.b16 %v551
    %v915 = vunpack.c.l.b16 %v552
    %v916 = vunpack.c.h.b16 %v552
    %v917 = vunpack.c.l.b16 %v553
    %v918 = vunpack.c.h.b16 %v553
    %v919 = vunpack.c.l.b16 %v554
    %v920 = vunpack.c.h.b16 %v554
    %v921 = vunpack.c.l.b16 %v555
    %v922 = vunpack.c.h.b16 %v555
    %v923 = vunpack.c.l.b16 %v556
    %v924 = vunpack.c.h.b16 %v556
    %v925 = vunpack.c.l.b16 %v557
    %v926 = vunpack.c.h.b16 %v557
    %v927 = vunpack.c.l.b16 %v558
    %v928 = vunpack.c.h.b16 %v558
    %v929 = vunpack.c.l.b16 %v559
    %v930 = vunpack.c.h.b16 %v559
    %v931 = vunpack.c.l.b16 %v560
    %v932 = vunpack.c.h.b16 %v560
    %v933 = vunpack.c.l.b16 %v561
    %v934 = vunpack.c.h.b16 %v561
    %v935 = vunpack.c.l.b16 %v562
    %v936 = vunpack.c.h.b16 %v562
    %v937 = vunpack.c.l.b16 %v563
    %v938 = vunpack.c.h.b16 %v563
    %v939 = vunpack.c.l.b16 %v564
    %v940 = vunpack.c.h.b16 %v564
    %v941 = vunpack.c.l.b16 %v565
    %v942 = vunpack.c.h.b16 %v565
    %v943 = vunpack.c.l.b16 %v566
    %v944 = vunpack.c.h.b16 %v566
    %v945 = vunpack.c.l.b16 %v567
    %v946 = vunpack.c.h.b16 %v567
    %v947 = vunpack.c.l.b16 %v568
    %v948 = vunpack.c.h.b16 %v568
    %v949 = vunpack.c.l.b16 %v569
    %v950 = vunpack.c.h.b16 %v569
    %v951 = vunpack.c.l.b16 %v570
    %v952 = vunpack.c.h.b16 %v570
    %v953 = vunpack.c.l.b16 %v571
    %v954 = vunpack.c.h.b16 %v571
    %v955 = vunpack.c.l.b16 %v572
    %v956 = vunpack.c.h.b16 %v572
    %v957 = vunpack.c.l.b16 %v573
    %v958 = vunpack.c.h.b16 %v573
    %v959 = vunpack.c.l.b16 %v574
    %v960 = vunpack.c.h.b16 %v574
    %v961 = vunpack.c.l.b16 %v575
    %v962 = vunpack.c.h.b16 %v575
    %v963 = vunpack.c.l.b16 %v576
    %v964 = vunpack.c.h.b16 %v576
    %v965 = vunpack.c.l.b16 %v577
    %v966 = vunpack.c.h.b16 %v577
    %v967 = vunpack.c.l.b16 %v578
    %v968 = vunpack.c.h.b16 %v578
    %v969 = vunpack.c.l.b16 %v579
    %v970 = vunpack.c.h.b16 %v579
    %v971 = vunpack.c.l.b16 %v580
    %v972 = vunpack.c.h.b16 %v580
    %v973 = vunpack.c.l.b16 %v581
    %v974 = vunpack.c.h.b16 %v581
    %v975 = vunpack.c.l.b16 %v582
    %v976 = vunpack.c.h.b16 %v582
    %v977 = vunpack.c.l.b16 %v583
    %v978 = vunpack.c.h.b16 %v583
    %v979 = vunpack.c.l.b16 %v584
    %v980 = vunpack.c.h.b16 %v584
    %v981 = vunpack.c.l.b16 %v585
    %v982 = vunpack.c.h.b16 %v585
    %v983 = vunpack.c.l.b16 %v586
    %v984 = vunpack.c.h.b16 %v586
    %v985 = vunpack.c.l.b16 %v587
    %v986 = vunpack.c.h.b16 %v587
    %v987 = vunpack.c.l.b16 %v588
    %v988 = vunpack.c.h.b16 %v588
    %v989 = vunpack.c.l.b16 %v589
    %v990 = vunpack.c.h.b16 %v589
    %v991 = vunpack.c.l.b16 %v590
    %v992 = vunpack.c.h.b16 %v590
    %v993 = vunpack.c.l.b16 %v591
    %v994 = vunpack.c.h.b16 %v591
    %v995 = vunpack.c.l.b16 %v592
    %v996 = vunpack.c.h.b16 %v592
    %v997 = vunpack.c.l.b16 %v593
    %v998 = vunpack.c.h.b16 %v593
    %v999 = vunpack.c.l.b16 %v594
    %v1000 = vunpack.c.h.b16 %v594
    %v1001 = vunpack.c.l.b16 %v595
    %v1002 = vunpack.c.h.b16 %v595
    %v1003 = vunpack.c.l.b16 %v596
    %v1004 = vunpack.c.h.b16 %v596
    %v1005 = vunpack.c.l.b16 %v597
    %v1006 = vunpack.c.h.b16 %v597
    %v1007 = vunpack.c.l.b16 %v598
    %v1008 = vunpack.c.h.b16 %v598
    %v1009 = vunpack.c.l.b16 %v599
    %v1010 = vunpack.c.h.b16 %v599
    %v1011 = vunpack.c.l.b16 %v600
    %v1012 = vunpack.c.h.b16 %v600
    %v1013 = vunpack.c.l.b16 %v601
    %v1014 = vunpack.c.h.b16 %v601
    %v1015 = vunpack.c.l.b16 %v602
    %v1016 = vunpack.c.h.b16 %v602
    %v1017 = vunpack.c.l.b16 %v603
    %v1018 = vunpack.c.h.b16 %v603
    %v1019 = vunpack.c.l.b16 %v604
    %v1020 = vunpack.c.h.b16 %v604
    %v1021 = vunpack.c.l.b16 %v605
    %v1022 = vunpack.c.h.b16 %v605
    %v1023 = vunpack.c.l.b16 %v606
    %v1024 = vunpack.c.h.b16 %v606
    %v1025 = vunpack.c.l.b16 %v607
    %v1026 = vunpack.c.h.b16 %v607
    %v1027 = vunpack.c.l.b16 %v608
    %v1028 = vunpack.c.h.b16 %v608
    %v1029 = vunpack.c.l.b16 %v609
    %v1030 = vunpack.c.h.b16 %v609
    %v1031 = vunpack.c.l.b16 %v610
    %v1032 = vunpack.c.h.b16 %v610
    %v1033 = vunpack.c.l.b16 %v611
    %v1034 = vunpack.c.h.b16 %v611
    %v1035 = vunpack.c.l.b16 %v612
    %v1036 = vunpack.c.h.b16 %v612
    %v1037 = vunpack.c.l.b16 %v613
    %v1038 = vunpack.c.h.b16 %v613
    %v1039 = vpack.c.b16 %v791, %v783
    %v1040 = vpack.c.b16 %v792, %v784
    %v1041 = vpack.c.b16 %v793, %v785
    %v1042 = vpack.c.b16 %v794, %v786
    %v1043 = vpack.c.b16 %v795, %v787
    %v1044 = vpack.c.b16 %v796, %v788
    %v1045 = vpack.c.b16 %v797, %v789
    %v1046 = vpack.c.b16 %v798, %v790
    %v1047 = vpack.c.b16 %v807, %v799
    %v1048 = vpack.c.b16 %v808, %v800
    %v1049 = vpack.c.b16 %v809, %v801
    %v1050 = vpack.c.b16 %v810, %v802
    %v1051 = vpack.c.b16 %v811, %v803
    %v1052 = vpack.c.b16 %v812, %v804
    %v1053 = vpack.c.b16 %v813, %v805
    %v1054 = vpack.c.b16 %v814, %v806
    %v1055 = vpack.c.b16 %v823, %v815
    %v1056 = vpack.c.b16 %v824, %v816
    %v1057 = vpack.c.b16 %v825, %v817
    %v1058 = vpack.c.b16 %v826, %v818
    %v1059 = vpack.c.b16 %v827, %v819
    %v1060 = vpack.c.b16 %v828, %v820
    %v1061 = vpack.c.b16 %v829, %v821
    %v1062 = vpack.c.b16 %v830, %v822
    %v1063 = vpack.c.b16 %v839, %v831
    %v1064 = vpack.c.b16 %v840, %v832
    %v1065 = vpack.c.b16 %v841, %v833
    %v1066 = vpack.c.b16 %v842, %v834
    %v1067 = vpack.c.b16 %v843, %v835
    %v1068 = vpack.c.b16 %v844, %v836
    %v1069 = vpack.c.b16 %v845, %v837
    %v1070 = vpack.c.b16 %v846, %v838
    %v1071 = vpack.c.b16 %v855, %v847
    %v1072 = vpack.c.b16 %v856, %v848
    %v1073 = vpack.c.b16 %v857, %v849
    %v1074 = vpack.c.b16 %v858, %v850
    %v1075 = vpack.c.b16 %v859, %v851
    %v1076 = vpack.c.b16 %v860, %v852
    %v1077 = vpack.c.b16 %v861, %v853
    %v1078 = vpack.c.b16 %v862, %v854
    %v1079 = vpack.c.b16 %v871, %v863
    %v1080 = vpack.c.b16 %v872, %v864
    %v1081 = vpack.c.b16 %v873, %v865
    %v1082 = vpack.c.b16 %v874, %v866
    %v1083 = vpack.c.b16 %v875, %v867
    %v1084 = vpack.c.b16 %v876, %v868
    %v1085 = vpack.c.b16 %v877, %v869
    %v1086 = vpack.c.b16 %v878, %v870
    %v1087 = vpack.c.b16 %v887, %v879
    %v1088 = vpack.c.b16 %v888, %v880
    %v1089 = vpack.c.b16 %v889, %v881
    %v1090 = vpack.c.b16 %v890, %v882
    %v1091 = vpack.c.b16 %v891, %v883
    %v1092 = vpack.c.b16 %v892, %v884
    %v1093 = vpack.c.b16 %v893, %v885
    %v1094 = vpack.c.b16 %v894, %v886
    %v1095 = vpack.c.b16 %v903, %v895
    %v1096 = vpack.c.b16 %v904, %v896
    %v1097 = vpack.c.b16 %v905, %v897
    %v1098 = vpack.c.b16 %v906, %v898
    %v1099 = vpack.c.b16 %v907, %v899
    %v1100 = vpack.c.b16 %v908, %v900
    %v1101 = vpack.c.b16 %v909, %v901
    %v1102 = vpack.c.b16 %v910, %v902
    %v1103 = vpack.c.b16 %v919, %v911
    %v1104 = vpack.c.b16 %v920, %v912
    %v1105 = vpack.c.b16 %v921, %v913
    %v1106 = vpack.c.b16 %v922, %v914
    %v1107 = vpack.c.b16 %v923, %v915
    %v1108 = vpack.c.b16 %v924, %v916
    %v1109 = vpack.c.b16 %v925, %v917
    %v1110 = vpack.c.b16 %v926, %v918
    %v1111 = vpack.c.b16 %v935, %v927
    %v1112 = vpack.c.b16 %v936, %v928
    %v1113 = vpack.c.b16 %v937, %v929
    %v1114 = vpack.c.b16 %v938, %v930
    %v1115 = vpack.c.b16 %v939, %v931
    %v1116 = vpack.c.b16 %v940, %v932
    %v1117 = vpack.c.b16 %v941, %v933
    %v1118 = vpack.c.b16 %v942, %v934
    %v1119 = vpack.c.b16 %v951, %v943
    %v1120 = vpack.c.b16 %v952, %v944
    %v1121 = vpack.c.b16 %v953, %v945
    %v1122 = vpack.c.b16 %v954, %v946
    %v1123 = vpack.c.b16 %v955, %v947
    %v1124 = vpack.c.b16 %v956, %v948
    %v1125 = vpack.c.b16 %v957, %v949
    %v1126 = vpack.c.b16 %v958, %v950
    %v1127 = vpack.c.b16 %v967, %v959
    %v1128 = vpack.c.b16 %v968, %v960
    %v1129 = vpack.c.b16 %v969, %v961
    %v1130 = vpack.c.b16 %v970, %v962
    %v1131 = vpack.c.b16 %v971, %v963
    %v1132 = vpack.c.b16 %v972, %v964
    %v1133 = vpack.c.b16 %v973, %v965
    %v1134 = vpack.c.b16 %v974, %v966
    %v1135 = vpack.c.b16 %v983, %v975
    %v1136 = vpack.c.b16 %v984, %v976
    %v1137 = vpack.c.b16 %v985, %v977
    %v1138 = vpack.c.b16 %v986, %v978
    %v1139 = vpack.c.b16 %v987, %v979
    %v1140 = vpack.c.b16 %v988, %v980
    %v1141 = vpack.c.b16 %v989, %v981
    %v1142 = vpack.c.b16 %v990, %v982
    %v1143 = vpack.c.b16 %v999, %v991
    %v1144 = vpack.c.b16 %v1000, %v992
    %v1145 = vpack.c.b16 %v1001, %v993
    %v1146 = vpack.c.b16 %v1002, %v994
    %v1147 = vpack.c.b16 %v1003, %v995
    %v1148 = vpack.c.b16 %v1004, %v996
    %v1149 = vpack.c.b16 %v1005, %v997
    %v1150 = vpack.c.b16 %v1006, %v998
    %v1151 = vpack.c.b16 %v1015, %v1007
    %v1152 = vpack.c.b16 %v1016, %v1008
    %v1153 = vpack.c.b16 %v1017, %v1009
    %v1154 = vpack.c.b16 %v1018, %v1010
    %v1155 = vpack.c.b16 %v1019, %v1011
    %v1156 = vpack.c.b16 %v1020, %v1012
    %v1157 = vpack.c.b16 %v1021, %v1013
    %v1158 = vpack.c.b16 %v1022, %v1014
    %v1159 = vpack.c.b16 %v1031, %v1023
    %v1160 = vpack.c.b16 %v1032, %v1024
    %v1161 = vpack.c.b16 %v1033, %v1025
    %v1162 = vpack.c.b16 %v1034, %v1026
    %v1163 = vpack.c.b16 %v1035, %v1027
    %v1164 = vpack.c.b16 %v1036, %v1028
    %v1165 = vpack.c.b16 %v1037, %v1029
    %v1166 = vpack.c.b16 %v1038, %v1030
    %1295 = vmatprep.subr.bf16.mxu0 %v1096
    %1296 = vmatpush1.bf16.msra.mxu0 %v1095
    %1297 = vmatprep.subr.bf16.mxu0 %v1088
    %1298 = vmatpush1.bf16.msra.mxu0 %v1087
    %1299 = vmatprep.subr.bf16.mxu0 %v1080
    %1300 = vmatpush1.bf16.msra.mxu0 %v1079
    %1301 = vmatprep.subr.bf16.mxu0 %v1072
    %1302 = vmatpush1.bf16.msra.mxu0 %v1071
    %1303 = vmatprep.subr.bf16.mxu0 %v1064
    %1304 = vmatpush1.bf16.msra.mxu0 %v1063
    %1305 = vmatprep.subr.bf16.mxu0 %v1056
    %1306 = vmatpush1.bf16.msra.mxu0 %v1055
    %1307 = vmatprep.subr.bf16.mxu0 %v1048
    %1308 = vmatpush1.bf16.msra.mxu0 %v1047
    %1309 = vmatprep.subr.bf16.mxu0 %v1040
    %1310 = vmatpush1.bf16.msra.mxu0 %v1039
    %1311 = vmatprep.subr.bf16.mxu0 %v1160
    %1312 = vmatpush2.bf16.msra.mxu0 %v1159
    %1313 = vmatprep.subr.bf16.mxu0 %v1152
    %1314 = vmatpush2.bf16.msra.mxu0 %v1151
    %1315 = vmatprep.subr.bf16.mxu0 %v1144
    %1316 = vmatpush2.bf16.msra.mxu0 %v1143
    %1317 = vmatprep.subr.bf16.mxu0 %v1136
    %1318 = vmatpush2.bf16.msra.mxu0 %v1135
    %1319 = vmatprep.subr.bf16.mxu0 %v1128
    %1320 = vmatpush2.bf16.msra.mxu0 %v1127
    %1321 = vmatprep.subr.bf16.mxu0 %v1120
    %1322 = vmatpush2.bf16.msra.mxu0 %v1119
    %1323 = vmatprep.subr.bf16.mxu0 %v1112
    %1324 = vmatpush2.bf16.msra.mxu0 %v1111
    %1325 = vmatprep.subr.bf16.mxu0 %v1104
    %1326 = vmatpush2.bf16.msra.mxu0 %v1103
    %1327 = vmatprep.mubr.bf16.mxu0 %v485
    %1328 = vmatmul.mubr.bf16.gmra.mxu0 %v484
    %v1329 = vpop.f32.mrf.mxu0
    %v1330 = vadd.f32 %v618, %v1329
    %v1331 = vpop.f32.mrf.mxu0
    %v1332 = vadd.f32 %v622, %v1331
    %v1333 = vpop.f32.mrf.mxu0
    %v1334 = vpop.f32.mrf.mxu0
    %1335 = vdwg.mxu0
    %1336 = vmatprep.subr.bf16.mxu0 %v1098
    %1337 = vmatpush1.bf16.msra.mxu0 %v1097
    %1338 = vmatprep.subr.bf16.mxu0 %v1090
    %1339 = vmatpush1.bf16.msra.mxu0 %v1089
    %1340 = vmatprep.subr.bf16.mxu0 %v1082
    %1341 = vmatpush1.bf16.msra.mxu0 %v1081
    %1342 = vmatprep.subr.bf16.mxu0 %v1074
    %1343 = vmatpush1.bf16.msra.mxu0 %v1073
    %1344 = vmatprep.subr.bf16.mxu0 %v1066
    %1345 = vmatpush1.bf16.msra.mxu0 %v1065
    %1346 = vmatprep.subr.bf16.mxu0 %v1058
    %1347 = vmatpush1.bf16.msra.mxu0 %v1057
    %1348 = vmatprep.subr.bf16.mxu0 %v1050
    %1349 = vmatpush1.bf16.msra.mxu0 %v1049
    %1350 = vmatprep.subr.bf16.mxu0 %v1042
    %1351 = vmatpush1.bf16.msra.mxu0 %v1041
    %1352 = vmatprep.subr.bf16.mxu0 %v1162
    %1353 = vmatpush2.bf16.msra.mxu0 %v1161
    %1354 = vmatprep.subr.bf16.mxu0 %v1154
    %1355 = vmatpush2.bf16.msra.mxu0 %v1153
    %1356 = vmatprep.subr.bf16.mxu0 %v1146
    %1357 = vmatpush2.bf16.msra.mxu0 %v1145
    %1358 = vmatprep.subr.bf16.mxu0 %v1138
    %1359 = vmatpush2.bf16.msra.mxu0 %v1137
    %1360 = vmatprep.subr.bf16.mxu0 %v1130
    %1361 = vmatpush2.bf16.msra.mxu0 %v1129
    %1362 = vmatprep.subr.bf16.mxu0 %v1122
    %1363 = vmatpush2.bf16.msra.mxu0 %v1121
    %1364 = vmatprep.subr.bf16.mxu0 %v1114
    %1365 = vmatpush2.bf16.msra.mxu0 %v1113
    %1366 = vmatprep.subr.bf16.mxu0 %v1106
    %1367 = vmatpush2.bf16.msra.mxu0 %v1105
    %1368 = vmatprep.mubr.bf16.mxu0 %v485
    %1369 = vmatmul.mubr.bf16.gmra.mxu0 %v484
    %v1370 = vpop.f32.mrf.mxu0
    %v1371 = vadd.f32 %v626, %v1370
    %v1372 = vpop.f32.mrf.mxu0
    %v1373 = vadd.f32 %v630, %v1372
    %v1374 = vpop.f32.mrf.mxu0
    %v1375 = vpop.f32.mrf.mxu0
    %1376 = vdwg.mxu0
    %1377 = vmatprep.subr.bf16.mxu0 %v1100
    %1378 = vmatpush1.bf16.msra.mxu0 %v1099
    %1379 = vmatprep.subr.bf16.mxu0 %v1092
    %1380 = vmatpush1.bf16.msra.mxu0 %v1091
    %1381 = vmatprep.subr.bf16.mxu0 %v1084
    %1382 = vmatpush1.bf16.msra.mxu0 %v1083
    %1383 = vmatprep.subr.bf16.mxu0 %v1076
    %1384 = vmatpush1.bf16.msra.mxu0 %v1075
    %1385 = vmatprep.subr.bf16.mxu0 %v1068
    %1386 = vmatpush1.bf16.msra.mxu0 %v1067
    %1387 = vmatprep.subr.bf16.mxu0 %v1060
    %1388 = vmatpush1.bf16.msra.mxu0 %v1059
    %1389 = vmatprep.subr.bf16.mxu0 %v1052
    %1390 = vmatpush1.bf16.msra.mxu0 %v1051
    %1391 = vmatprep.subr.bf16.mxu0 %v1044
    %1392 = vmatpush1.bf16.msra.mxu0 %v1043
    %1393 = vmatprep.subr.bf16.mxu0 %v1164
    %1394 = vmatpush2.bf16.msra.mxu0 %v1163
    %1395 = vmatprep.subr.bf16.mxu0 %v1156
    %1396 = vmatpush2.bf16.msra.mxu0 %v1155
    %1397 = vmatprep.subr.bf16.mxu0 %v1148
    %1398 = vmatpush2.bf16.msra.mxu0 %v1147
    %1399 = vmatprep.subr.bf16.mxu0 %v1140
    %1400 = vmatpush2.bf16.msra.mxu0 %v1139
    %1401 = vmatprep.subr.bf16.mxu0 %v1132
    %1402 = vmatpush2.bf16.msra.mxu0 %v1131
    %1403 = vmatprep.subr.bf16.mxu0 %v1124
    %1404 = vmatpush2.bf16.msra.mxu0 %v1123
    %1405 = vmatprep.subr.bf16.mxu0 %v1116
    %1406 = vmatpush2.bf16.msra.mxu0 %v1115
    %1407 = vmatprep.subr.bf16.mxu0 %v1108
    %1408 = vmatpush2.bf16.msra.mxu0 %v1107
    %1409 = vmatprep.mubr.bf16.mxu0 %v485
    %1410 = vmatmul.mubr.bf16.gmra.mxu0 %v484
    %v1411 = vpop.f32.mrf.mxu0
    %v1412 = vadd.f32 %v634, %v1411
    %v1413 = vpop.f32.mrf.mxu0
    %v1414 = vadd.f32 %v638, %v1413
    %v1415 = vpop.f32.mrf.mxu0
    %v1416 = vpop.f32.mrf.mxu0
    %1417 = vdwg.mxu0
    %1418 = vmatprep.subr.bf16.mxu0 %v1102
    %1419 = vmatpush1.bf16.msra.mxu0 %v1101
    %1420 = vmatprep.subr.bf16.mxu0 %v1094
    %1421 = vmatpush1.bf16.msra.mxu0 %v1093
    %1422 = vmatprep.subr.bf16.mxu0 %v1086
    %1423 = vmatpush1.bf16.msra.mxu0 %v1085
    %1424 = vmatprep.subr.bf16.mxu0 %v1078
    %1425 = vmatpush1.bf16.msra.mxu0 %v1077
    %1426 = vmatprep.subr.bf16.mxu0 %v1070
    %1427 = vmatpush1.bf16.msra.mxu0 %v1069
    %1428 = vmatprep.subr.bf16.mxu0 %v1062
    %1429 = vmatpush1.bf16.msra.mxu0 %v1061
    %1430 = vmatprep.subr.bf16.mxu0 %v1054
    %1431 = vmatpush1.bf16.msra.mxu0 %v1053
    %1432 = vmatprep.subr.bf16.mxu0 %v1046
    %1433 = vmatpush1.bf16.msra.mxu0 %v1045
    %1434 = vmatprep.subr.bf16.mxu0 %v1166
    %1435 = vmatpush2.bf16.msra.mxu0 %v1165
    %1436 = vmatprep.subr.bf16.mxu0 %v1158
    %1437 = vmatpush2.bf16.msra.mxu0 %v1157
    %1438 = vmatprep.subr.bf16.mxu0 %v1150
    %1439 = vmatpush2.bf16.msra.mxu0 %v1149
    %1440 = vmatprep.subr.bf16.mxu0 %v1142
    %1441 = vmatpush2.bf16.msra.mxu0 %v1141
    %1442 = vmatprep.subr.bf16.mxu0 %v1134
    %1443 = vmatpush2.bf16.msra.mxu0 %v1133
    %1444 = vmatprep.subr.bf16.mxu0 %v1126
    %1445 = vmatpush2.bf16.msra.mxu0 %v1125
    %1446 = vmatprep.subr.bf16.mxu0 %v1118
    %1447 = vmatpush2.bf16.msra.mxu0 %v1117
    %1448 = vmatprep.subr.bf16.mxu0 %v1110
    %1449 = vmatpush2.bf16.msra.mxu0 %v1109
    %1450 = vmatprep.mubr.bf16.mxu0 %v485
    %1451 = vmatmul.mubr.bf16.gmra.mxu0 %v484
    %v1452 = vpop.f32.mrf.mxu0
    %v1453 = vadd.f32 %v642, %v1452
    %v1454 = vpop.f32.mrf.mxu0
    %v1455 = vadd.f32 %v646, %v1454
    %v1456 = vpop.f32.mrf.mxu0
    %v1457 = vpop.f32.mrf.mxu0
    %1458 = vdwg.mxu0
    %v1459 = vxor.u32 %v1330, 2147483648
    %v1460 = vxor.u32 %v1332, 2147483648
    %v1461 = vxor.u32 %v1371, 2147483648
    %v1462 = vxor.u32 %v1373, 2147483648
    %v1463 = vxor.u32 %v1412, 2147483648
    %v1464 = vxor.u32 %v1414, 2147483648
    %v1465 = vxor.u32 %v1453, 2147483648
    %v1466 = vxor.u32 %v1455, 2147483648
    %v1467 = vmul.f32 %v1459, 1.442695
    %v1468 = vpow.pop %v1467
    %v1469 = vmul.f32 %v1460, 1.442695
    %v1470 = vpow.pop %v1469
    %v1471 = vmul.f32 %v1461, 1.442695
    %v1472 = vpow.pop %v1471
    %v1473 = vmul.f32 %v1462, 1.442695
    %v1474 = vpow.pop %v1473
    %v1475 = vmul.f32 %v1463, 1.442695
    %v1476 = vpow.pop %v1475
    %v1477 = vmul.f32 %v1464, 1.442695
    %v1478 = vpow.pop %v1477
    %v1479 = vmul.f32 %v1465, 1.442695
    %v1480 = vpow.pop %v1479
    %v1481 = vmul.f32 %v1466, 1.442695
    %v1482 = vpow.pop %v1481
    %v1483 = vadd.f32 %v1468, 1.0
    %v1484 = vadd.f32 %v1470, 1.0
    %v1485 = vadd.f32 %v1472, 1.0
    %v1486 = vadd.f32 %v1474, 1.0
    %v1487 = vadd.f32 %v1476, 1.0
    %v1488 = vadd.f32 %v1478, 1.0
    %v1489 = vadd.f32 %v1480, 1.0
    %v1490 = vadd.f32 %v1482, 1.0
    %v1491 = vrcp.pop %v1483
    %v1492 = vmul.f32 1.0, %v1491
    %v1493 = vrcp.pop %v1484
    %v1494 = vmul.f32 1.0, %v1493
    %v1495 = vrcp.pop %v1485
    %v1496 = vmul.f32 1.0, %v1495
    %v1497 = vrcp.pop %v1486
    %v1498 = vmul.f32 1.0, %v1497
    %v1499 = vrcp.pop %v1487
    %v1500 = vmul.f32 1.0, %v1499
    %v1501 = vrcp.pop %v1488
    %v1502 = vmul.f32 1.0, %v1501
    %v1503 = vrcp.pop %v1489
    %v1504 = vmul.f32 1.0, %v1503
    %v1505 = vrcp.pop %v1490
    %v1506 = vmul.f32 1.0, %v1505
    %1507 = vst [vmem:[%s6] sm:$0xff] %v1492
    %1508 = vst [vmem:[%s6 + $0x8] sm:$0xff] %v1494
    %1509 = vst [vmem:[%s6 + $0x10] sm:$0xff] %v1496
    %1510 = vst [vmem:[%s6 + $0x18] sm:$0xff] %v1498
    %1511 = vst [vmem:[%s6 + $0x20] sm:$0xff] %v1500
    %1512 = vst [vmem:[%s6 + $0x28] sm:$0xff] %v1502
    %1513 = vst [vmem:[%s6 + $0x30] sm:$0xff] %v1504
    %1514 = vst [vmem:[%s6 + $0x38] sm:$0xff] %v1506
    // Predicated region
    $region34: #{decoder_forward.1} parent=1 // pred_check
      _
    $region35: #{decoder_forward.1} parent=1 // pred_check_branch
      %1516 = sbr.rel (0) target = $region37
    $region36: #{decoder_forward.1} parent=1 // pred_region
      _
    $region37: #{decoder_forward.1} parent=1 // pred_fallthru
      _
    // Predicated region
    $region38: #{decoder_forward.1} parent=1 // pred_check
      _
    $region39: #{decoder_forward.1} parent=1 // pred_check_branch
      %1518 = sbr.rel (0) target = $region41
    $region40: #{decoder_forward.1} parent=1 // pred_region
      _
    $region41: #{decoder_forward.1} parent=1 // pred_fallthru
      _
    %1519 = vsyncpa [#allocation3], 1
    %1520 = vsyncpa [#allocation5], 1

</llo_original>
